<compile_context>
chip_gen: v5e
topology: v5e:2x2
jax: 0.10.0
libtpu: 0.0.40
codegen_flags: <defaults>
</compile_context>

<pallas_src>
import jax
import jax.numpy as jnp
from jax.experimental import pallas as pl
from jax.experimental.pallas import tpu as pltpu

BN_EPS = 1e-5
_LANE = 128
_SUBLANE = 8


def _round_up(x, m):
    return ((x + m - 1) // m) * m


# ---------------------------------------------------------------------------
# Kernel: out = (x @ W1' + b1') @ W2 + b2        (BN folded into W1'/b1')
# ---------------------------------------------------------------------------
def classblock_kernel(x_ref, w1_ref, b1_ref, w2_ref, b2_ref, out_ref):
    # relu=False -> no LeakyReLU; droprate>0 -> Dropout is identity in eval mode.
    xb = x_ref[...].astype(w1_ref.dtype)                     # f32 -> bf16 on-chip
    h = jnp.dot(xb, w1_ref[...], preferred_element_type=jnp.float32)
    h = (h + b1_ref[...]).astype(w2_ref.dtype)               # bf16 for classifier MXU
    y = jnp.dot(h, w2_ref[...], preferred_element_type=jnp.float32)
    out_ref[...] = (y + b2_ref[...]).astype(out_ref.dtype)


# ---------------------------------------------------------------------------
# One-time parameter preparation (constant transform, outside the kernel)
# ---------------------------------------------------------------------------
def prepare_params(params, compute_dtype=jnp.bfloat16):
    """Fold inference BN into W1/b1, pad lane dims to 128, cast weights to bf16."""
    w1, b1 = params["w1"], params["b1"]                  # (D, NB), (1, NB)
    w2, b2 = params["w2"], params["b2"]                  # (NB, C), (1, C)
    gamma, beta = params["gamma"], params["beta"]
    mean, var = params["running_mean"], params["running_var"]

    scale = gamma * jax.lax.rsqrt(var + BN_EPS)          # (1, NB)
    w1f = w1 * scale                                     # fold BN scale into W1
    b1f = (b1 - mean) * scale + beta                     # fold BN shift into b1

    D, NB = w1f.shape
    C = w2.shape[1]
    NBp = _round_up(NB, _LANE)
    Cp = _round_up(C, _LANE)

    w1p = jnp.zeros((D, NBp), jnp.float32).at[:, :NB].set(w1f)
    b1p = jnp.zeros((1, NBp), jnp.float32).at[:, :NB].set(b1f)
    w2p = jnp.zeros((NBp, Cp), jnp.float32).at[:NB, :C].set(w2)
    b2p = jnp.zeros((1, Cp), jnp.float32).at[:, :C].set(b2)

    return dict(
        w1=w1p.astype(compute_dtype),
        b1=b1p,                       # biases stay f32 (added after f32 accum)
        w2=w2p.astype(compute_dtype),
        b2=b2p,
        class_num=C,
    )


# ---------------------------------------------------------------------------
# Wrapper
# ---------------------------------------------------------------------------
def class_block_forward(x, prepped, *, batch_tile=512, out_dtype=jnp.float32):
    """x: (B, input_dim) float32. prepped: output of prepare_params."""
    B, D = x.shape
    w1, b1, w2, b2 = prepped["w1"], prepped["b1"], prepped["w2"], prepped["b2"]
    C = prepped["class_num"]
    NBp = w1.shape[1]
    Cp = w2.shape[1]

    # --- VMEM budget (per generation): physical capacity minus headroom -----
    try:
        vmem_cap = int(pltpu.get_tpu_info().vmem_capacity_bytes)
    except Exception:
        vmem_cap = 64 << 20                           # conservative (v7x size)
    budget = vmem_cap - (16 << 20)                    # headroom for compiler scratch

    # --- Batch tile: multiple of 8, >=2 tiles when batch allows (v7x 2 TCs) --
    n_tiles_target = max(2, -(-B // batch_tile))      # ceil(B / batch_tile), >= 2
    TB = _round_up(-(-B // n_tiles_target), _SUBLANE)
    TB = min(TB, _round_up(B, _SUBLANE))
    TB = max(TB, _SUBLANE)

    f32, bf16 = 4, 2

    def vmem_est(tb):
        return (2 * tb * D * f32                      # x tiles (double-buffered, f32)
                + 2 * tb * Cp * f32                   # out tiles (double-buffered)
                + 2 * (D * NBp + NBp * Cp) * bf16     # W1, W2 (resident; conservative x2)
                + 2 * (NBp + Cp) * f32                # b1, b2
                + tb * NBp * f32)                     # in-register/internal h slab

    # Shrink TB until the tile plan fits the per-generation budget (v7x: 48 MiB).
    while TB > _SUBLANE and vmem_est(TB) > budget:
        TB = max(_SUBLANE, _round_up(TB // 2, _SUBLANE))

    est = vmem_est(TB)
    vmem_limit = int(min(budget, max(32 << 20, 2 * est)))

    grid = (pl.cdiv(B, TB),)   # tail batch tile is masked by Pallas; no pad copy

    out = pl.pallas_call(
        classblock_kernel,
        out_shape=jax.ShapeDtypeStruct((B, Cp), out_dtype),
        grid_spec=pltpu.PrefetchScalarGridSpec(
            num_scalar_prefetch=0,
            grid=grid,
            in_specs=[
                # x stays f32 in HBM; cast to bf16 inside the kernel.
                # (If v5e profile shows exposed x DMA, pipeline_mode=pl.Buffered(3).)
                pl.BlockSpec((TB, D), lambda i: (i, 0)),      # x: batch-tiled
                pl.BlockSpec((D, NBp), lambda i: (0, 0)),     # W1: resident
                pl.BlockSpec((1, NBp), lambda i: (0, 0)),     # b1: resident
                pl.BlockSpec((NBp, Cp), lambda i: (0, 0)),    # W2: resident
                pl.BlockSpec((1, Cp), lambda i: (0, 0)),      # b2: resident
            ],
            out_specs=pl.BlockSpec((TB, Cp), lambda i: (i, 0)),
        ),
        compiler_params=pltpu.CompilerParams(
            dimension_semantics=("parallel",),
            vmem_limit_bytes=vmem_limit,
        ),
    )(x, w1, b1, w2, b2)

    # Strip class padding (batch dim was never padded).
    return out[:, :C]


# ---------------------------------------------------------------------------
# Init matching weights_init_kaiming / weights_init_classifier (eval-mode BN)
# ---------------------------------------------------------------------------
def init_params(key, input_dim, num_bottleneck, class_num):
    k1, k2, k3 = jax.random.split(key, 3)

    # add_block Linear: kaiming_normal_(mode='fan_out', a=0) -> std = sqrt(2/fan_out)
    std_w1 = (2.0 / num_bottleneck) ** 0.5
    w1 = std_w1 * jax.random.normal(k1, (input_dim, num_bottleneck), jnp.float32)
    b1 = jnp.zeros((1, num_bottleneck), jnp.float32)

    # BatchNorm1d: weight ~ N(1.0, 0.02), bias = 0, running stats = (0, 1)
    gamma = 1.0 + 0.02 * jax.random.normal(k2, (1, num_bottleneck), jnp.float32)
    beta = jnp.zeros((1, num_bottleneck), jnp.float32)
    running_mean = jnp.zeros((1, num_bottleneck), jnp.float32)
    running_var = jnp.ones((1, num_bottleneck), jnp.float32)

    # classifier Linear: weight ~ N(0, 0.001), bias = 0
    w2 = 0.001 * jax.random.normal(k3, (num_bottleneck, class_num), jnp.float32)
    b2 = jnp.zeros((1, class_num), jnp.float32)

    return dict(w1=w1, b1=b1, gamma=gamma, beta=beta,
                running_mean=running_mean, running_var=running_var,
                w2=w2, b2=b2)


def reference_forward(x, p):
    h = x @ p["w1"] + p["b1"]
    h = (h - p["running_mean"]) * jax.lax.rsqrt(p["running_var"] + BN_EPS) \
        * p["gamma"] + p["beta"]
    return h @ p["w2"] + p["b2"]


if __name__ == "__main__":
    B, INPUT_DIM, NUM_BOTTLENECK, CLASS_NUM = 8, 32, 64, 16

    key = jax.random.PRNGKey(0)
    kx, kp = jax.random.split(key)
    x = jax.random.normal(kx, (B, INPUT_DIM), jnp.float32)
    params = init_params(kp, INPUT_DIM, NUM_BOTTLENECK, CLASS_NUM)

    prepped = prepare_params(params)
    out = class_block_forward(x, prepped)
    out = jax.block_until_ready(out)

    ref = reference_forward(x, params)
    assert out.shape == (B, CLASS_NUM)
    # bf16 matmuls vs f32 reference -> slightly looser tolerance.
    assert jnp.allclose(out, ref, atol=1e-3, rtol=2e-2), \
        float(jnp.max(jnp.abs(out - ref)))

    print("KERNEL_OK")
</pallas_src>

<mosaic_0001>
module attributes {stable_mosaic.version = 11 : i64} {
  func.func @classblock_kernel(%arg0: i32, %arg1: memref<8x32xf32, #tpu.memory_space<vmem>>, %arg2: memref<32x128xbf16, #tpu.memory_space<vmem>>, %arg3: memref<1x128xf32, #tpu.memory_space<vmem>>, %arg4: memref<128x128xbf16, #tpu.memory_space<vmem>>, %arg5: memref<1x128xf32, #tpu.memory_space<vmem>>, %arg6: memref<8x128xf32, #tpu.memory_space<vmem>>) attributes {dimension_semantics = [#tpu.dimension_semantics<parallel>], iteration_bounds = array<i64: 1>, scalar_prefetch = 0 : i64, scratch_operands = 0 : i64, tpu.core_type = #tpu.core_type<tc>, window_params = [{transform_indices = @transform_0, window_bounds = array<i64: 8, 32>}, {pipeline_mode = #tpu.pipeline_mode<synchronous>, transform_indices = @transform_1, window_bounds = array<i64: 32, 128>}, {pipeline_mode = #tpu.pipeline_mode<synchronous>, transform_indices = @transform_2, window_bounds = array<i64: 1, 128>}, {pipeline_mode = #tpu.pipeline_mode<synchronous>, transform_indices = @transform_3, window_bounds = array<i64: 128, 128>}, {pipeline_mode = #tpu.pipeline_mode<synchronous>, transform_indices = @transform_4, window_bounds = array<i64: 1, 128>}, {transform_indices = @transform_5, window_bounds = array<i64: 8, 128>}]} {
    %c0 = arith.constant 0 : index
    %c0_0 = arith.constant 0 : index
    %0 = vector.load %arg1[%c0, %c0_0] : memref<8x32xf32, #tpu.memory_space<vmem>>, vector<8x32xf32>
    %1 = arith.truncf %0 : vector<8x32xf32> to vector<8x32xbf16>
    %c0_1 = arith.constant 0 : index
    %c0_2 = arith.constant 0 : index
    %2 = vector.load %arg2[%c0_1, %c0_2] : memref<32x128xbf16, #tpu.memory_space<vmem>>, vector<32x128xbf16>
    %cst = arith.constant dense<0.000000e+00> : vector<8x128xf32>
    %3 = tpu.matmul %1, %2, %cst {dimension_numbers = #tpu.dot_dimension_numbers<[1], [0], [0], [1], [0, 0, 1, 1], [], []>} : vector<8x32xbf16>, vector<32x128xbf16>, vector<8x128xf32> -> vector<8x128xf32>
    %c0_3 = arith.constant 0 : index
    %c0_4 = arith.constant 0 : index
    %4 = vector.load %arg3[%c0_3, %c0_4] : memref<1x128xf32, #tpu.memory_space<vmem>>, vector<1x128xf32>
    %5 = vector.broadcast %4 : vector<1x128xf32> to vector<8x128xf32>
    %6 = arith.addf %3, %5 : vector<8x128xf32>
    %7 = arith.truncf %6 : vector<8x128xf32> to vector<8x128xbf16>
    %c0_5 = arith.constant 0 : index
    %c0_6 = arith.constant 0 : index
    %8 = vector.load %arg4[%c0_5, %c0_6] : memref<128x128xbf16, #tpu.memory_space<vmem>>, vector<128x128xbf16>
    %cst_7 = arith.constant dense<0.000000e+00> : vector<8x128xf32>
    %9 = tpu.matmul %7, %8, %cst_7 {dimension_numbers = #tpu.dot_dimension_numbers<[1], [0], [0], [1], [0, 0, 1, 1], [], []>} : vector<8x128xbf16>, vector<128x128xbf16>, vector<8x128xf32> -> vector<8x128xf32>
    %c0_8 = arith.constant 0 : index
    %c0_9 = arith.constant 0 : index
    %10 = vector.load %arg5[%c0_8, %c0_9] : memref<1x128xf32, #tpu.memory_space<vmem>>, vector<1x128xf32>
    %11 = vector.broadcast %10 : vector<1x128xf32> to vector<8x128xf32>
    %12 = arith.addf %9, %11 : vector<8x128xf32>
    %c0_10 = arith.constant 0 : index
    %c0_11 = arith.constant 0 : index
    %13 = vector.load %arg6[%c0_10, %c0_11] : memref<8x128xf32, #tpu.memory_space<vmem>>, vector<8x128xf32>
    tpu.vector_store %arg6[%c0_10, %c0_11], %12 {strides = array<i32>} : memref<8x128xf32, #tpu.memory_space<vmem>>, vector<8x128xf32>,
    return
  }
  func.func @transform_0(%arg0: i32) -> (i32, i32) {
    %c0_i32 = arith.constant 0 : i32
    %c0_i32_0 = arith.constant 0 : i32
    return %arg0, %c0_i32 : i32, i32
  }
  func.func @transform_1(%arg0: i32) -> (i32, i32) {
    %c0_i32 = arith.constant 0 : i32
    %c0_i32_0 = arith.constant 0 : i32
    %c0_i32_1 = arith.constant 0 : i32
    return %c0_i32, %c0_i32_0 : i32, i32
  }
  func.func @transform_2(%arg0: i32) -> (i32, i32) {
    %c0_i32 = arith.constant 0 : i32
    %c0_i32_0 = arith.constant 0 : i32
    %c0_i32_1 = arith.constant 0 : i32
    return %c0_i32, %c0_i32_0 : i32, i32
  }
  func.func @transform_3(%arg0: i32) -> (i32, i32) {
    %c0_i32 = arith.constant 0 : i32
    %c0_i32_0 = arith.constant 0 : i32
    %c0_i32_1 = arith.constant 0 : i32
    return %c0_i32, %c0_i32_0 : i32, i32
  }
  func.func @transform_4(%arg0: i32) -> (i32, i32) {
    %c0_i32 = arith.constant 0 : i32
    %c0_i32_0 = arith.constant 0 : i32
    %c0_i32_1 = arith.constant 0 : i32
    return %c0_i32, %c0_i32_0 : i32, i32
  }
  func.func @transform_5(%arg0: i32) -> (i32, i32) {
    %c0_i32 = arith.constant 0 : i32
    %c0_i32_0 = arith.constant 0 : i32
    return %arg0, %c0_i32 : i32, i32
  }
}

</mosaic_0001>

<llo_original>
// kernel: tpu_custom_call.1
$region0: #{tpu_custom_call.1}
  #allocation0 [shape = 'u32[]', space=smem, size = 0x4, offset = 0x4, fixed_abs, tag = 'smem constant byte address 0x4 - core index']
  #allocation1 [shape = 'u32[72,128]{1,0:T(1,128)}', space=vmem, size = 0x9000, scoped, tag = 'internal scratch']
  %s0 = inlined_call_operand.hbm [shape: f32[8,32], index: 0, kind: input, shape index: {}]
  %s1 = inlined_call_operand.hbm [shape: bf16[32,128], index: 1, kind: input, shape index: {}]
  %s2 = inlined_call_operand.vmem [shape: f32[1,128], index: 2, kind: input, shape index: {}]
  %s3 = inlined_call_operand.hbm [shape: bf16[128,128], index: 3, kind: input, shape index: {}]
  %s4 = inlined_call_operand.vmem [shape: f32[1,128], index: 4, kind: input, shape index: {}]
  %s5 = inlined_call_operand.hbm [shape: f32[8,128], index: 5, kind: output, shape index: {}]
  %s6 = sld [smem:[#allocation0]]
  $region42: #{tpu_custom_call.1} parent=0
    _
  %s8 = ssub.s32 1, %s6
  %s9 = scalar_select 0, %s8, %s6
  $region1: #{tpu_custom_call.1} parent=0
    #allocation2 [shape = 'u8[4096]{0}', space=vmem, size = 0x1000, scoped, tag = 'input window, operand 0, single buffered']
    #allocation3 [shape = 's32[1]{0}', space=sflag, size = 0x4, scoped, tag = 'scoped memory for tpu_custom_call.1']
    #allocation4 [shape = 's32[1]{0}', space=sflag, size = 0x4, scoped, tag = 'scoped memory for tpu_custom_call.1']
    #allocation5 [shape = 'u8[8192]{0}', space=vmem, size = 0x2000, scoped, tag = 'input window, operand 1, single buffered']
    #allocation6 [shape = 's32[1]{0}', space=sflag, size = 0x4, scoped, tag = 'scoped memory for tpu_custom_call.1']
    #allocation7 [shape = 'u8[32768]{0}', space=vmem, size = 0x8000, scoped, tag = 'input window, operand 3, single buffered']
    #allocation8 [shape = 'u8[4096]{0}', space=vmem, size = 0x1000, scoped, tag = 'output window, operand 0, single buffered']
    %10 = vsyncpa [#allocation3], 0
    %11 = vsyncpa [#allocation6], 0
    %12 = vsyncpa [#allocation4], 0
    // Predicated region
    $region2: #{tpu_custom_call.1} parent=1 // pred_check
      _
    $region3: #{tpu_custom_call.1} parent=1 // pred_check_branch
      %14 = sbr.rel (0) target = $region5
    $region4: #{tpu_custom_call.1} parent=1 // pred_region
      %16 = vsyncadd [#allocation3], 0
      %s18 = sshll.u32 %s0, 4
      %s19 = int_to_ptr.hbm [resolvable:$true] %s18
      %s20 = sshll.u32 [#allocation2], 4
      %s21 = int_to_ptr.vmem [resolvable:$true] %s20
      %23 = dma.hbm_to_vmem [thread:$0]  %s19, 128, %s21, [#allocation3]
    $region5: #{tpu_custom_call.1} parent=1 // pred_fallthru
      _
    // Predicated region
    $region6: #{tpu_custom_call.1} parent=1 // pred_check
      _
    $region7: #{tpu_custom_call.1} parent=1 // pred_check_branch
      %25 = sbr.rel (0) target = $region9
    $region8: #{tpu_custom_call.1} parent=1 // pred_region
      %27 = vsyncadd [#allocation6], 0
      %s28 = sshll.u32 %s1, 4
      %s29 = int_to_ptr.hbm [resolvable:$true] %s28
      %s30 = sshll.u32 [#allocation5], 4
      %s31 = int_to_ptr.vmem [resolvable:$true] %s30
      %36 = dma.hbm_to_vmem [thread:$0]  %s29, 256, %s31, [#allocation6], 64, 64, 4
    $region9: #{tpu_custom_call.1} parent=1 // pred_fallthru
      _
    // Predicated region
    $region10: #{tpu_custom_call.1} parent=1 // pred_check
      _
    $region11: #{tpu_custom_call.1} parent=1 // pred_check_branch
      %38 = sbr.rel (0) target = $region13
    $region12: #{tpu_custom_call.1} parent=1 // pred_region
      _
    $region13: #{tpu_custom_call.1} parent=1 // pred_fallthru
      _
    // Predicated region
    $region14: #{tpu_custom_call.1} parent=1 // pred_check
      _
    $region15: #{tpu_custom_call.1} parent=1 // pred_check_branch
      %40 = sbr.rel (0) target = $region17
    $region16: #{tpu_custom_call.1} parent=1 // pred_region
      %42 = vsyncadd [#allocation6], 0
      %s43 = sshll.u32 %s3, 4
      %s44 = int_to_ptr.hbm [resolvable:$true] %s43
      %s45 = sshll.u32 [#allocation7], 4
      %s46 = int_to_ptr.vmem [resolvable:$true] %s45
      %51 = dma.hbm_to_vmem [thread:$0]  %s44, 1024, %s46, [#allocation6], 64, 64, 4
    $region17: #{tpu_custom_call.1} parent=1 // pred_fallthru
      _
    // Predicated region
    $region18: #{tpu_custom_call.1} parent=1 // pred_check
      _
    $region19: #{tpu_custom_call.1} parent=1 // pred_check_branch
      %53 = sbr.rel (0) target = $region21
    $region20: #{tpu_custom_call.1} parent=1 // pred_region
      _
    $region21: #{tpu_custom_call.1} parent=1 // pred_fallthru
      _
    // Predicated region
    $region22: #{tpu_custom_call.1} parent=1 // pred_check
      _
    $region23: #{tpu_custom_call.1} parent=1 // pred_check_branch
      %55 = sbr.rel (0) target = $region25
    $region24: #{tpu_custom_call.1} parent=1 // pred_region
      %57 = dma.done [#allocation3], 128
    $region25: #{tpu_custom_call.1} parent=1 // pred_fallthru
      _
    // Predicated region
    $region26: #{tpu_custom_call.1} parent=1 // pred_check
      _
    $region27: #{tpu_custom_call.1} parent=1 // pred_check_branch
      %59 = sbr.rel (0) target = $region29
    $region28: #{tpu_custom_call.1} parent=1 // pred_region
      %61 = dma.done [#allocation6], 256
    $region29: #{tpu_custom_call.1} parent=1 // pred_fallthru
      _
    // Predicated region
    $region30: #{tpu_custom_call.1} parent=1 // pred_check
      _
    $region31: #{tpu_custom_call.1} parent=1 // pred_check_branch
      %63 = sbr.rel (0) target = $region33
    $region32: #{tpu_custom_call.1} parent=1 // pred_region
      %65 = dma.done [#allocation6], 1024
    $region33: #{tpu_custom_call.1} parent=1 // pred_fallthru
      _
    %v67 = vld [vmem:[#allocation2] sm:$0xff]
    %v68 = vpack.c.bf16 %v67, %v67
    %v69 = vld [vmem:[#allocation5] sm:$0xf]
    %v70 = vld [vmem:[#allocation5 + $0x4] sm:$0xf]
    %v71 = vld [vmem:[#allocation5 + $0x8] sm:$0xf]
    %v72 = vld [vmem:[#allocation5 + $0xc] sm:$0xf]
    %v73 = vld [vmem:[%s2] sm:$0x1]
    %v75 = vperm.slane %v73, 0
    %v81 = vunpack.c.l.b16 %v69
    %v82 = vunpack.c.l.b16 %v70
    %v83 = vunpack.c.l.b16 %v71
    %v84 = vunpack.c.l.b16 %v72
    %v85 = vpack.c.b16 %v82, %v81
    %v86 = vpack.c.b16 %v84, %v83
    %vm89 = vcmask 261120
    %v91 = vsel %vm89, %v68, 0
    %93 = vmatpush.bf16.msra.mxu0 0
    %94 = vmatpush.bf16.msra.mxu0 0
    %95 = vmatpush.bf16.msra.mxu0 0
    %96 = vmatpush.bf16.msra.mxu0 0
    %97 = vmatpush.bf16.msra.mxu0 0
    %98 = vmatpush.bf16.msra.mxu0 0
    %99 = vmatpush.bf16.msra.mxu0 %v86
    %100 = vmatpush.bf16.msra.mxu0 %v85
    %101 = vmatmul.bf16.gmra.mxu0 %v91
    %v102 = vpop.f32.mrf.mxu0
    %v103 = vadd.f32 %v75, %v102
    %v104 = vpop.f32.mrf.mxu0
    %105 = vdwg.mxu0
    %v106 = vpack.c.bf16 %v103, %v103
    %v107 = vld [vmem:[#allocation7] sm:$0xf]
    %v108 = vld [vmem:[#allocation7 + $0x4] sm:$0xf]
    %v109 = vld [vmem:[#allocation7 + $0x8] sm:$0xf]
    %v110 = vld [vmem:[#allocation7 + $0xc] sm:$0xf]
    %v111 = vld [vmem:[#allocation7 + $0x10] sm:$0xf]
    %v112 = vld [vmem:[#allocation7 + $0x14] sm:$0xf]
    %v113 = vld [vmem:[#allocation7 + $0x18] sm:$0xf]
    %v114 = vld [vmem:[#allocation7 + $0x1c] sm:$0xf]
    %v115 = vld [vmem:[#allocation7 + $0x20] sm:$0xf]
    %v116 = vld [vmem:[#allocation7 + $0x24] sm:$0xf]
    %v117 = vld [vmem:[#allocation7 + $0x28] sm:$0xf]
    %v118 = vld [vmem:[#allocation7 + $0x2c] sm:$0xf]
    %v119 = vld [vmem:[#allocation7 + $0x30] sm:$0xf]
    %v120 = vld [vmem:[#allocation7 + $0x34] sm:$0xf]
    %v121 = vld [vmem:[#allocation7 + $0x38] sm:$0xf]
    %v122 = vld [vmem:[#allocation7 + $0x3c] sm:$0xf]
    %v123 = vld [vmem:[%s4] sm:$0x1]
    %v125 = vperm.slane %v123, 0
    %v143 = vunpack.c.l.b16 %v107
    %v144 = vunpack.c.l.b16 %v108
    %v145 = vunpack.c.l.b16 %v109
    %v146 = vunpack.c.l.b16 %v110
    %v147 = vunpack.c.l.b16 %v111
    %v148 = vunpack.c.l.b16 %v112
    %v149 = vunpack.c.l.b16 %v113
    %v150 = vunpack.c.l.b16 %v114
    %v151 = vunpack.c.l.b16 %v115
    %v152 = vunpack.c.l.b16 %v116
    %v153 = vunpack.c.l.b16 %v117
    %v154 = vunpack.c.l.b16 %v118
    %v155 = vunpack.c.l.b16 %v119
    %v156 = vunpack.c.l.b16 %v120
    %v157 = vunpack.c.l.b16 %v121
    %v158 = vunpack.c.l.b16 %v122
    %v159 = vpack.c.b16 %v144, %v143
    %v160 = vpack.c.b16 %v146, %v145
    %v161 = vpack.c.b16 %v148, %v147
    %v162 = vpack.c.b16 %v150, %v149
    %v163 = vpack.c.b16 %v152, %v151
    %v164 = vpack.c.b16 %v154, %v153
    %v165 = vpack.c.b16 %v156, %v155
    %v166 = vpack.c.b16 %v158, %v157
    %175 = vmatpush.bf16.msra.mxu0 %v166
    %176 = vmatpush.bf16.msra.mxu0 %v165
    %177 = vmatpush.bf16.msra.mxu0 %v164
    %178 = vmatpush.bf16.msra.mxu0 %v163
    %179 = vmatpush.bf16.msra.mxu0 %v162
    %180 = vmatpush.bf16.msra.mxu0 %v161
    %181 = vmatpush.bf16.msra.mxu0 %v160
    %182 = vmatpush.bf16.msra.mxu0 %v159
    %183 = vmatmul.bf16.gmra.mxu0 %v106
    %v184 = vpop.f32.mrf.mxu0
    %v185 = vadd.f32 %v125, %v184
    %v186 = vpop.f32.mrf.mxu0
    %187 = vdwg.mxu0
    %188 = vst [vmem:[#allocation8] sm:$0xff] %v185
    // Predicated region
    $region34: #{tpu_custom_call.1} parent=1 // pred_check
      _
    $region35: #{tpu_custom_call.1} parent=1 // pred_check_branch
      %190 = sbr.rel (0) target = $region37
    $region36: #{tpu_custom_call.1} parent=1 // pred_region
      %192 = vsyncadd [#allocation4], 0
      %s194 = sshll.u32 [#allocation8], 4
      %s195 = int_to_ptr.vmem [resolvable:$true] %s194
      %s196 = sshll.u32 %s5, 4
      %s197 = int_to_ptr.hbm [resolvable:$true] %s196
      %199 = dma.vmem_to_hbm [thread:$0]  %s195, 128, %s197, [#allocation4]
    $region37: #{tpu_custom_call.1} parent=1 // pred_fallthru
      _
    // Predicated region
    $region38: #{tpu_custom_call.1} parent=1 // pred_check
      _
    $region39: #{tpu_custom_call.1} parent=1 // pred_check_branch
      %201 = sbr.rel (0) target = $region41
    $region40: #{tpu_custom_call.1} parent=1 // pred_region
      %203 = dma.done [#allocation4], 128
    $region41: #{tpu_custom_call.1} parent=1 // pred_fallthru
      _
    %204 = vsyncpa [#allocation3], 1
    %205 = vsyncpa [#allocation6], 1
    %206 = vsyncpa [#allocation4], 1

</llo_original>
